<compile_context>
chip_gen: v6e
topology: v6e:2x2x1
jax: 0.10.0
libtpu: 0.0.40
codegen_flags: <defaults>
</compile_context>

<pallas_src>
import numpy as np
import jax
import jax.numpy as jnp
from jax.experimental import pallas as pl
from jax.experimental.pallas import tpu as pltpu

# ---- surrogate printed-electronics activation / inverter (elementwise) -----
# TODO(synk): the real ACT / INV circuit models (pTanh / pInv with eta_fault
# tables) are external modules not shipped with pLayer; deterministic
# tanh-based surrogates are used. With len(ACT)=len(INV)=1 and 'robust' mode,
# CoFF_ACT / CoFF_NEG are constant ones, exactly as in the PyTorch code, so
# they are folded away entirely.
ACT_ETA = (0.0, 1.0, 0.0, 2.0)   # act(z) = e0 + e1 * tanh((z - e2) * e3)
INV_ETA = (0.0, 1.0, 0.0, 2.0)   # inv(a) = e0 - e1 * tanh((a - e2) * e3)


def _player_kernel(a_ref, wp_ref, wn_ref, bias_ref, colpn_ref, gsum_ref,
                   out_ref, pw_ref):
    """One (fault replica f, E tile); all V noise replicas batched.

    zc = [w_pos|gp] @ a + [w_neg|gn] @ inv(a) + ones-rail bias
    z, zg = split(zc); a_new = act(z); MAC_power partial accumulated in pw_ref.
    """
    nout = out_ref.shape[2]
    bf16 = jnp.bfloat16

    a = a_ref[0]              # [V, n_in, e_tile]   (E on lanes)
    wp = wp_ref[0]            # [V, 2*Nout, n_in]   = [w_pos | gp] (input rows)
    wn = wn_ref[0]            # [V, 2*Nout, n_in]   = [w_neg | gn]
    bias = bias_ref[0]        # [V, 2*Nout, 1]      ones-rail contribution
    colpn = colpn_ref[0]      # [V, n_in, 2]        per-row sums of gp / gn
    g_sum = gsum_ref[...]     # [1, Nout, 1]        sum_m g_tilde (all M rows)

    # surrogate inverter on the real input rows (rails handled analytically)
    a_neg = INV_ETA[0] - INV_ETA[1] * jnp.tanh((a - INV_ETA[2]) * INV_ETA[3])

    # fused MAC + power-cross contraction: batched over V, contract n_in,
    # bf16 MXU operands with f32 accumulation, 2*Nout outputs in one pass.
    # TODO(synk): if n_in/Nout stay this small in production, replace the
    # padded MXU einsums with VPU broadcast-FMAs over the E lane axis.
    zc = (jnp.einsum('vkm,vme->vke', wp.astype(bf16), a.astype(bf16),
                     preferred_element_type=jnp.float32)
          + jnp.einsum('vkm,vme->vke', wn.astype(bf16), a_neg.astype(bf16),
                       preferred_element_type=jnp.float32)
          + bias)                                   # [V, 2*Nout, e_tile]
    z = zc[:, :nout, :]                             # MAC output
    zg = zc[:, nout:, :]                            # power cross term

    # surrogate activation; lane-dense store
    a_new = ACT_ETA[0] + ACT_ETA[1] * jnp.tanh((z - ACT_ETA[2]) * ACT_ETA[3])
    out_ref[0] = a_new.astype(out_ref.dtype)

    # --- MAC_power partial for this (f, E-tile) ----------------------------
    # sum_{v,e,m,n} g[m,n]*(x*pos + x_neg*neg - z)^2 expanded with pos^2=pos,
    # neg^2=neg, pos*neg=0; the activation-independent ones-rail piece is
    # added in the wrapper, the zeros rail only contributes through g_sum.
    s12 = (jnp.sum((a * a) * colpn[:, :, 0:1])
           + jnp.sum((a_neg * a_neg) * colpn[:, :, 1:2]))
    t3 = -2.0 * jnp.sum(z * zg)
    t4 = jnp.sum((z * z) * g_sum)
    p_tile = s12 + t3 + t4

    @pl.when(pl.program_id(1) == 0)
    def _():
        pw_ref[...] = jnp.zeros_like(pw_ref)
    pw_ref[...] += p_tile


def _pick_e_tile(E):
    # TODO(synk): per-target tuning -- v6e/v5e (128 MiB VMEM) can take ~2x the
    # v7x (64 MiB) tile; 512 lanes keeps all three comfortably under budget.
    for t in (512, 256, 128):
        if E % t == 0:
            return t
    return E


def p_layer_forward(a_prev, theta_param, key, *, gmin=0.01, gmax=10.0,
                    epsilon=0.05, pgmin=0.1):
    F, V, E, n_in = a_prev.shape
    M = n_in + 2
    Nout = theta_param.shape[1]
    f32 = jnp.float32

    # --- `theta` property: clamp to [-gmax, gmax], prune |theta| < gmin ---
    theta_c = jnp.clip(theta_param.astype(f32), -gmax, gmax)
    theta = jnp.where(jnp.abs(theta_c) < gmin, 0.0, theta_c)

    # --- `theta_noisy`: multiplicative uniform noise in [1-eps, 1+eps];
    #     FaultMask == ones (no faults) so it is folded away. One shared noise
    #     draw is used for W / MAC / MAC_power. ---
    noise = (jax.random.uniform(key, (F, V, M, Nout), dtype=f32) * 2.0 - 1.0) * epsilon + 1.0
    theta_noisy = theta[None, None] * noise

    # --- W = |theta_noisy| / (sum_M |theta_noisy| + 1e-10), sign split ---
    abs_tn = jnp.abs(theta_noisy)
    w_full = abs_tn / (jnp.sum(abs_tn, axis=2, keepdims=True) + 1e-10)
    pos = theta_noisy >= 0.0
    w_pos = jnp.where(pos, w_full, 0.0)
    w_neg = w_full - w_pos

    # --- g_tilde: clamped, un-pruned theta as in torch; g_min clamped to
    #     avoid inf/NaN in the diagnostic ---
    g_initial = jnp.abs(theta_c)
    g_min = jnp.maximum(jnp.min(g_initial, axis=0, keepdims=True), 1e-12)
    g_tilde = g_initial * (pgmin / g_min)                        # [M, Nout]
    gp = jnp.where(pos, g_tilde[None, None], 0.0)                # [F,V,M,Nout]
    gn = g_tilde[None, None] - gp

    # --- fused, pre-transposed weight slabs over the n_in real input rows ---
    two_n = 2 * Nout
    wp_cat = jnp.transpose(
        jnp.concatenate([w_pos[:, :, :n_in, :], gp[:, :, :n_in, :]], axis=-1),
        (0, 1, 3, 2))                                            # [F,V,2N,n_in]
    wn_cat = jnp.transpose(
        jnp.concatenate([w_neg[:, :, :n_in, :], gn[:, :, :n_in, :]], axis=-1),
        (0, 1, 3, 2))                                            # [F,V,2N,n_in]

    # --- analytic rail handling -------------------------------------------
    inv1 = float(INV_ETA[0] - INV_ETA[1] * np.tanh((1.0 - INV_ETA[2]) * INV_ETA[3]))
    bias_z = w_pos[:, :, n_in, :] + inv1 * w_neg[:, :, n_in, :]            # [F,V,Nout]
    bias_zg = gp[:, :, n_in, :] + inv1 * gn[:, :, n_in, :]
    bias_cat = jnp.concatenate([bias_z, bias_zg], axis=-1)[..., None]      # [F,V,2N,1]
    # activation-independent ones-rail power term (zeros rail contributes 0)
    rail12 = E * jnp.sum(gp[:, :, n_in, :] + (inv1 ** 2) * gn[:, :, n_in, :])

    colpn = jnp.stack([jnp.sum(gp[:, :, :n_in, :], axis=-1),
                       jnp.sum(gn[:, :, :n_in, :], axis=-1)], axis=-1)     # [F,V,n_in,2]
    g_sum = jnp.sum(g_tilde, axis=0)[None, :, None]                        # [1,Nout,1]

    # --- lane-dense layout: batch axis E on lanes ---------------------------
    a_t = jnp.transpose(a_prev.astype(f32), (0, 1, 3, 2))                  # [F,V,n_in,E]

    e_tile = _pick_e_tile(E)
    n_e = E // e_tile

    a_new_t, pw = pl.pallas_call(
        _player_kernel,
        out_shape=(jax.ShapeDtypeStruct((F, V, Nout, E), f32),
                   jax.ShapeDtypeStruct((F, 1, 128), f32)),
        grid=(F, n_e),
        in_specs=[
            pl.BlockSpec((1, V, n_in, e_tile), lambda f, e: (f, 0, 0, e)),
            pl.BlockSpec((1, V, two_n, n_in), lambda f, e: (f, 0, 0, 0)),
            pl.BlockSpec((1, V, two_n, n_in), lambda f, e: (f, 0, 0, 0)),
            pl.BlockSpec((1, V, two_n, 1), lambda f, e: (f, 0, 0, 0)),
            pl.BlockSpec((1, V, n_in, 2), lambda f, e: (f, 0, 0, 0)),
            pl.BlockSpec((1, Nout, 1), lambda f, e: (0, 0, 0)),
        ],
        out_specs=(
            pl.BlockSpec((1, V, Nout, e_tile), lambda f, e: (f, 0, 0, e)),
            pl.BlockSpec((1, 1, 128), lambda f, e: (f, 0, 0)),
        ),
        compiler_params=pltpu.CompilerParams(
            # TODO(synk): on v7x, if F is 1 or unbalanced, move the "parallel"
            # tag to the E-tile axis and sum per-core power partials instead.
            dimension_semantics=("parallel", "arbitrary"),
            vmem_limit_bytes=48 * 1024 * 1024,
        ),
    )(a_t, wp_cat, wn_cat, bias_cat, colpn, g_sum)

    a_new = jnp.transpose(a_new_t, (0, 1, 3, 2))                           # [F,V,E,Nout]
    mac_power = (jnp.sum(pw[:, 0, 0]) + rail12) / (E * V * F)
    return a_new, mac_power


def init_theta(key, n_in, n_out, gmin, gmax, eta2):
    """Replicates pLayer.__init__ theta construction deterministically."""
    u = jax.random.uniform(key, (n_in + 2, n_out), dtype=jnp.float32)
    theta = u / 100.0 + gmin
    theta = theta.at[-1, :].add(gmax)
    theta = theta.at[-2, :].set(
        eta2 / (1.0 - eta2) * (jnp.sum(theta[:-2, :], axis=0) + theta[-1, :]))
    return theta


if __name__ == "__main__":
    key = jax.random.PRNGKey(0)
    k_theta, k_noise, k_x = jax.random.split(key, 3)

    # small shapes consistent with the module: F=N_fault, V=N_train, E=batch
    F, V, E = 2, 2, 8
    n_in, n_out = 6, 8
    gmin, gmax, epsilon, pgmin = 0.01, 10.0, 0.05, 0.1
    eta2 = 0.1   # surrogate for ACT[0].eta_fault[0, 2]

    theta_param = init_theta(k_theta, n_in, n_out, gmin, gmax, eta2)
    a_prev = jax.random.uniform(k_x, (F, V, E, n_in), dtype=jnp.float32)

    a_new, mac_power = p_layer_forward(
        a_prev, theta_param, k_noise,
        gmin=gmin, gmax=gmax, epsilon=epsilon, pgmin=pgmin)
    jax.block_until_ready((a_new, mac_power))

    assert a_new.shape == (F, V, E, n_out), a_new.shape
    assert bool(jnp.all(jnp.isfinite(a_new))) and bool(jnp.isfinite(mac_power))
    print("KERNEL_OK")
</pallas_src>

<mosaic_0001>
module attributes {stable_mosaic.version = 11 : i64} {
  func.func @_player_kernel(%arg0: i32, %arg1: i32, %arg2: memref<1x2x6x8xf32, #tpu.memory_space<vmem>>, %arg3: memref<1x2x16x6xf32, #tpu.memory_space<vmem>>, %arg4: memref<1x2x16x6xf32, #tpu.memory_space<vmem>>, %arg5: memref<1x2x16x1xf32, #tpu.memory_space<vmem>>, %arg6: memref<1x2x6x2xf32, #tpu.memory_space<vmem>>, %arg7: memref<1x8x1xf32, #tpu.memory_space<vmem>>, %arg8: memref<1x2x8x8xf32, #tpu.memory_space<vmem>>, %arg9: memref<1x1x128xf32, #tpu.memory_space<vmem>>) attributes {dimension_semantics = [#tpu.dimension_semantics<parallel>, #tpu.dimension_semantics<arbitrary>], iteration_bounds = array<i64: 2, 1>, scalar_prefetch = 0 : i64, scratch_operands = 0 : i64, tpu.core_type = #tpu.core_type<tc>, window_params = [{transform_indices = @transform_0, window_bounds = array<i64: 1, 2, 6, 8>}, {transform_indices = @transform_1, window_bounds = array<i64: 1, 2, 16, 6>}, {transform_indices = @transform_2, window_bounds = array<i64: 1, 2, 16, 6>}, {transform_indices = @transform_3, window_bounds = array<i64: 1, 2, 16, 1>}, {transform_indices = @transform_4, window_bounds = array<i64: 1, 2, 6, 2>}, {pipeline_mode = #tpu.pipeline_mode<synchronous>, transform_indices = @transform_5, window_bounds = array<i64: 1, 8, 1>}, {transform_indices = @transform_6, window_bounds = array<i64: 1, 2, 8, 8>}, {transform_indices = @transform_7, window_bounds = array<i64: 1, 1, 128>}]} {
    %c0 = arith.constant 0 : index
    %c0_0 = arith.constant 0 : index
    %c0_1 = arith.constant 0 : index
    %c0_2 = arith.constant 0 : index
    %0 = vector.load %arg2[%c0, %c0_0, %c0_1, %c0_2] : memref<1x2x6x8xf32, #tpu.memory_space<vmem>>, vector<1x2x6x8xf32>
    %1 = vector.shape_cast %0 : vector<1x2x6x8xf32> to vector<2x6x8xf32>
    %c0_3 = arith.constant 0 : index
    %c0_4 = arith.constant 0 : index
    %c0_5 = arith.constant 0 : index
    %c0_6 = arith.constant 0 : index
    %2 = vector.load %arg3[%c0_3, %c0_4, %c0_5, %c0_6] : memref<1x2x16x6xf32, #tpu.memory_space<vmem>>, vector<1x2x16x6xf32>
    %3 = vector.shape_cast %2 : vector<1x2x16x6xf32> to vector<2x16x6xf32>
    %c0_7 = arith.constant 0 : index
    %c0_8 = arith.constant 0 : index
    %c0_9 = arith.constant 0 : index
    %c0_10 = arith.constant 0 : index
    %4 = vector.load %arg4[%c0_7, %c0_8, %c0_9, %c0_10] : memref<1x2x16x6xf32, #tpu.memory_space<vmem>>, vector<1x2x16x6xf32>
    %5 = vector.shape_cast %4 : vector<1x2x16x6xf32> to vector<2x16x6xf32>
    %c0_11 = arith.constant 0 : index
    %c0_12 = arith.constant 0 : index
    %c0_13 = arith.constant 0 : index
    %c0_14 = arith.constant 0 : index
    %6 = vector.load %arg5[%c0_11, %c0_12, %c0_13, %c0_14] : memref<1x2x16x1xf32, #tpu.memory_space<vmem>>, vector<1x2x16x1xf32>
    %7 = vector.shape_cast %6 : vector<1x2x16x1xf32> to vector<2x16x1xf32>
    %c0_15 = arith.constant 0 : index
    %c0_16 = arith.constant 0 : index
    %c0_17 = arith.constant 0 : index
    %c0_18 = arith.constant 0 : index
    %8 = vector.load %arg6[%c0_15, %c0_16, %c0_17, %c0_18] : memref<1x2x6x2xf32, #tpu.memory_space<vmem>>, vector<1x2x6x2xf32>
    %9 = vector.shape_cast %8 : vector<1x2x6x2xf32> to vector<2x6x2xf32>
    %c0_19 = arith.constant 0 : index
    %c0_20 = arith.constant 0 : index
    %c0_21 = arith.constant 0 : index
    %10 = vector.load %arg7[%c0_19, %c0_20, %c0_21] : memref<1x8x1xf32, #tpu.memory_space<vmem>>, vector<1x8x1xf32>
    %cst = arith.constant 0.000000e+00 : f32
    %11 = vector.broadcast %cst : f32 to vector<2x6x8xf32>
    %12 = arith.subf %1, %11 : vector<2x6x8xf32>
    %cst_22 = arith.constant 2.000000e+00 : f32
    %13 = vector.broadcast %cst_22 : f32 to vector<2x6x8xf32>
    %14 = arith.mulf %12, %13 : vector<2x6x8xf32>
    %15 = math.tanh %14 : vector<2x6x8xf32>
    %cst_23 = arith.constant 1.000000e+00 : f32
    %16 = vector.broadcast %cst_23 : f32 to vector<2x6x8xf32>
    %17 = arith.mulf %16, %15 : vector<2x6x8xf32>
    %cst_24 = arith.constant 0.000000e+00 : f32
    %18 = vector.broadcast %cst_24 : f32 to vector<2x6x8xf32>
    %19 = arith.subf %18, %17 : vector<2x6x8xf32>
    %20 = arith.truncf %3 : vector<2x16x6xf32> to vector<2x16x6xbf16>
    %21 = arith.truncf %1 : vector<2x6x8xf32> to vector<2x6x8xbf16>
    "tpu.trace_start"() <{level = 10 : i32, message = "vkm,vme->vke"}> : () -> ()
    %cst_25 = arith.constant dense<0.000000e+00> : vector<2x16x8xf32>
    %22 = tpu.matmul %20, %21, %cst_25 {dimension_numbers = #tpu.dot_dimension_numbers<[2], [1], [1], [2], [0, 0, 0, 1, 1, 2], [0], [0]>} : vector<2x16x6xbf16>, vector<2x6x8xbf16>, vector<2x16x8xf32> -> vector<2x16x8xf32>
    "tpu.trace_stop"() : () -> ()
    %23 = arith.truncf %5 : vector<2x16x6xf32> to vector<2x16x6xbf16>
    %24 = arith.truncf %19 : vector<2x6x8xf32> to vector<2x6x8xbf16>
    "tpu.trace_start"() <{level = 10 : i32, message = "vkm,vme->vke"}> : () -> ()
    %cst_26 = arith.constant dense<0.000000e+00> : vector<2x16x8xf32>
    %25 = tpu.matmul %23, %24, %cst_26 {dimension_numbers = #tpu.dot_dimension_numbers<[2], [1], [1], [2], [0, 0, 0, 1, 1, 2], [0], [0]>} : vector<2x16x6xbf16>, vector<2x6x8xbf16>, vector<2x16x8xf32> -> vector<2x16x8xf32>
    "tpu.trace_stop"() : () -> ()
    %26 = arith.addf %22, %25 : vector<2x16x8xf32>
    %27 = vector.broadcast %7 : vector<2x16x1xf32> to vector<2x16x8xf32>
    %28 = arith.addf %26, %27 : vector<2x16x8xf32>
    %29 = vector.extract_strided_slice %28 {offsets = [0, 0, 0], sizes = [2, 8, 8], strides = [1, 1, 1]} : vector<2x16x8xf32> to vector<2x8x8xf32>
    %30 = vector.extract_strided_slice %28 {offsets = [0, 8, 0], sizes = [2, 8, 8], strides = [1, 1, 1]} : vector<2x16x8xf32> to vector<2x8x8xf32>
    %cst_27 = arith.constant 0.000000e+00 : f32
    %31 = vector.broadcast %cst_27 : f32 to vector<2x8x8xf32>
    %32 = arith.subf %29, %31 : vector<2x8x8xf32>
    %cst_28 = arith.constant 2.000000e+00 : f32
    %33 = vector.broadcast %cst_28 : f32 to vector<2x8x8xf32>
    %34 = arith.mulf %32, %33 : vector<2x8x8xf32>
    %35 = math.tanh %34 : vector<2x8x8xf32>
    %cst_29 = arith.constant 1.000000e+00 : f32
    %36 = vector.broadcast %cst_29 : f32 to vector<2x8x8xf32>
    %37 = arith.mulf %36, %35 : vector<2x8x8xf32>
    %cst_30 = arith.constant 0.000000e+00 : f32
    %38 = vector.broadcast %cst_30 : f32 to vector<2x8x8xf32>
    %39 = arith.addf %38, %37 : vector<2x8x8xf32>
    %c0_31 = arith.constant 0 : index
    %c0_32 = arith.constant 0 : index
    %c0_33 = arith.constant 0 : index
    %c0_34 = arith.constant 0 : index
    %40 = vector.load %arg8[%c0_31, %c0_32, %c0_33, %c0_34] : memref<1x2x8x8xf32, #tpu.memory_space<vmem>>, vector<1x2x8x8xf32>
    %41 = vector.shape_cast %40 : vector<1x2x8x8xf32> to vector<2x8x8xf32>
    %42 = vector.shape_cast %39 : vector<2x8x8xf32> to vector<1x2x8x8xf32>
    tpu.vector_store %arg8[%c0_31, %c0_32, %c0_33, %c0_34], %42 {strides = array<i32>} : memref<1x2x8x8xf32, #tpu.memory_space<vmem>>, vector<1x2x8x8xf32>,
    %43 = arith.mulf %1, %1 : vector<2x6x8xf32>
    %44 = vector.extract_strided_slice %9 {offsets = [0, 0, 0], sizes = [2, 6, 1], strides = [1, 1, 1]} : vector<2x6x2xf32> to vector<2x6x1xf32>
    %45 = vector.broadcast %44 : vector<2x6x1xf32> to vector<2x6x8xf32>
    %46 = arith.mulf %43, %45 : vector<2x6x8xf32>
    %47 = vector.shape_cast %46 : vector<2x6x8xf32> to vector<1x2x6x8xf32>
    %cst_35 = arith.constant dense<0.000000e+00> : vector<1xf32>
    %48 = vector.multi_reduction <add>, %47, %cst_35 [1, 2, 3] : vector<1x2x6x8xf32> to vector<1xf32>
    %49 = vector.shape_cast %48 : vector<1xf32> to vector<1x1x1x1xf32>
    %50 = vector.extract %49[0, 0, 0, 0] : f32 from vector<1x1x1x1xf32>
    %51 = arith.mulf %19, %19 : vector<2x6x8xf32>
    %52 = vector.extract_strided_slice %9 {offsets = [0, 0, 1], sizes = [2, 6, 1], strides = [1, 1, 1]} : vector<2x6x2xf32> to vector<2x6x1xf32>
    %53 = vector.broadcast %52 : vector<2x6x1xf32> to vector<2x6x8xf32>
    %54 = arith.mulf %51, %53 : vector<2x6x8xf32>
    %55 = vector.shape_cast %54 : vector<2x6x8xf32> to vector<1x2x6x8xf32>
    %cst_36 = arith.constant dense<0.000000e+00> : vector<1xf32>
    %56 = vector.multi_reduction <add>, %55, %cst_36 [1, 2, 3] : vector<1x2x6x8xf32> to vector<1xf32>
    %57 = vector.shape_cast %56 : vector<1xf32> to vector<1x1x1x1xf32>
    %58 = vector.extract %57[0, 0, 0, 0] : f32 from vector<1x1x1x1xf32>
    %59 = arith.addf %50, %58 : f32
    %60 = arith.mulf %29, %30 : vector<2x8x8xf32>
    %61 = vector.shape_cast %60 : vector<2x8x8xf32> to vector<1x2x8x8xf32>
    %cst_37 = arith.constant dense<0.000000e+00> : vector<1xf32>
    %62 = vector.multi_reduction <add>, %61, %cst_37 [1, 2, 3] : vector<1x2x8x8xf32> to vector<1xf32>
    %63 = vector.shape_cast %62 : vector<1xf32> to vector<1x1x1x1xf32>
    %64 = vector.extract %63[0, 0, 0, 0] : f32 from vector<1x1x1x1xf32>
    %cst_38 = arith.constant -2.000000e+00 : f32
    %65 = arith.mulf %cst_38, %64 : f32
    %66 = arith.mulf %29, %29 : vector<2x8x8xf32>
    %67 = vector.broadcast %10 : vector<1x8x1xf32> to vector<2x8x8xf32>
    %68 = arith.mulf %66, %67 : vector<2x8x8xf32>
    %69 = vector.shape_cast %68 : vector<2x8x8xf32> to vector<1x2x8x8xf32>
    %cst_39 = arith.constant dense<0.000000e+00> : vector<1xf32>
    %70 = vector.multi_reduction <add>, %69, %cst_39 [1, 2, 3] : vector<1x2x8x8xf32> to vector<1xf32>
    %71 = vector.shape_cast %70 : vector<1xf32> to vector<1x1x1x1xf32>
    %72 = vector.extract %71[0, 0, 0, 0] : f32 from vector<1x1x1x1xf32>
    %73 = arith.addf %59, %65 : f32
    %74 = arith.addf %73, %72 : f32
    %c0_i32 = arith.constant 0 : i32
    %75 = arith.cmpi eq, %arg1, %c0_i32 : i32
    %76 = arith.extui %75 : i1 to i32
    %c0_i32_40 = arith.constant 0 : i32
    %77 = arith.cmpi ne, %76, %c0_i32_40 : i32
    scf.if %77 {
      %cst_47 = arith.constant 0.000000e+00 : f32
      %82 = vector.broadcast %cst_47 : f32 to vector<1x1x128xf32>
      %c0_48 = arith.constant 0 : index
      %c0_49 = arith.constant 0 : index
      %c0_50 = arith.constant 0 : index
      %83 = vector.load %arg9[%c0_48, %c0_49, %c0_50] : memref<1x1x128xf32, #tpu.memory_space<vmem>>, vector<1x1x128xf32>
      tpu.vector_store %arg9[%c0_48, %c0_49, %c0_50], %82 {strides = array<i32>} : memref<1x1x128xf32, #tpu.memory_space<vmem>>, vector<1x1x128xf32>,
    } else {
    }
    %c0_41 = arith.constant 0 : index
    %c0_42 = arith.constant 0 : index
    %c0_43 = arith.constant 0 : index
    %78 = vector.load %arg9[%c0_41, %c0_42, %c0_43] : memref<1x1x128xf32, #tpu.memory_space<vmem>>, vector<1x1x128xf32>
    %79 = vector.broadcast %74 : f32 to vector<1x1x128xf32>
    %80 = arith.addf %78, %79 : vector<1x1x128xf32>
    %c0_44 = arith.constant 0 : index
    %c0_45 = arith.constant 0 : index
    %c0_46 = arith.constant 0 : index
    %81 = vector.load %arg9[%c0_44, %c0_45, %c0_46] : memref<1x1x128xf32, #tpu.memory_space<vmem>>, vector<1x1x128xf32>
    tpu.vector_store %arg9[%c0_44, %c0_45, %c0_46], %80 {strides = array<i32>} : memref<1x1x128xf32, #tpu.memory_space<vmem>>, vector<1x1x128xf32>,
    return
  }
  func.func @transform_0(%arg0: i32, %arg1: i32) -> (i32, i32, i32, i32) {
    %c0_i32 = arith.constant 0 : i32
    %c0_i32_0 = arith.constant 0 : i32
    %c0_i32_1 = arith.constant 0 : i32
    return %arg0, %c0_i32, %c0_i32_0, %arg1 : i32, i32, i32, i32
  }
  func.func @transform_1(%arg0: i32, %arg1: i32) -> (i32, i32, i32, i32) {
    %c0_i32 = arith.constant 0 : i32
    %c0_i32_0 = arith.constant 0 : i32
    %c0_i32_1 = arith.constant 0 : i32
    %c0_i32_2 = arith.constant 0 : i32
    return %arg0, %c0_i32, %c0_i32_0, %c0_i32_1 : i32, i32, i32, i32
  }
  func.func @transform_2(%arg0: i32, %arg1: i32) -> (i32, i32, i32, i32) {
    %c0_i32 = arith.constant 0 : i32
    %c0_i32_0 = arith.constant 0 : i32
    %c0_i32_1 = arith.constant 0 : i32
    %c0_i32_2 = arith.constant 0 : i32
    return %arg0, %c0_i32, %c0_i32_0, %c0_i32_1 : i32, i32, i32, i32
  }
  func.func @transform_3(%arg0: i32, %arg1: i32) -> (i32, i32, i32, i32) {
    %c0_i32 = arith.constant 0 : i32
    %c0_i32_0 = arith.constant 0 : i32
    %c0_i32_1 = arith.constant 0 : i32
    %c0_i32_2 = arith.constant 0 : i32
    return %arg0, %c0_i32, %c0_i32_0, %c0_i32_1 : i32, i32, i32, i32
  }
  func.func @transform_4(%arg0: i32, %arg1: i32) -> (i32, i32, i32, i32) {
    %c0_i32 = arith.constant 0 : i32
    %c0_i32_0 = arith.constant 0 : i32
    %c0_i32_1 = arith.constant 0 : i32
    %c0_i32_2 = arith.constant 0 : i32
    return %arg0, %c0_i32, %c0_i32_0, %c0_i32_1 : i32, i32, i32, i32
  }
  func.func @transform_5(%arg0: i32, %arg1: i32) -> (i32, i32, i32) {
    %c0_i32 = arith.constant 0 : i32
    %c0_i32_0 = arith.constant 0 : i32
    %c0_i32_1 = arith.constant 0 : i32
    %c0_i32_2 = arith.constant 0 : i32
    return %c0_i32, %c0_i32_0, %c0_i32_1 : i32, i32, i32
  }
  func.func @transform_6(%arg0: i32, %arg1: i32) -> (i32, i32, i32, i32) {
    %c0_i32 = arith.constant 0 : i32
    %c0_i32_0 = arith.constant 0 : i32
    %c0_i32_1 = arith.constant 0 : i32
    return %arg0, %c0_i32, %c0_i32_0, %arg1 : i32, i32, i32, i32
  }
  func.func @transform_7(%arg0: i32, %arg1: i32) -> (i32, i32, i32) {
    %c0_i32 = arith.constant 0 : i32
    %c0_i32_0 = arith.constant 0 : i32
    %c0_i32_1 = arith.constant 0 : i32
    return %arg0, %c0_i32, %c0_i32_0 : i32, i32, i32
  }
}

</mosaic_0001>

<llo_original>
// kernel: tpu_custom_call.1
$region0: #{tpu_custom_call.1}
  #allocation0 [shape = 'u32[]', space=smem, size = 0x4, offset = 0x4, fixed_abs, tag = 'smem constant byte address 0x4 - core index']
  #allocation1 [shape = 'u32[144,128]{1,0:T(1,128)}', space=vmem, size = 0x12000, scoped, tag = 'internal scratch']
  %s0 = inlined_call_operand.vmem [shape: f32[2,2,6,8], index: 0, kind: input, shape index: {}]
  %s1 = inlined_call_operand.vmem [shape: f32[2,2,16,6], index: 1, kind: input, shape index: {}]
  %s2 = inlined_call_operand.vmem [shape: f32[2,2,16,6], index: 2, kind: input, shape index: {}]
  %s3 = inlined_call_operand.vmem [shape: f32[2,2,16,1], index: 3, kind: input, shape index: {}]
  %s4 = inlined_call_operand.vmem [shape: f32[2,2,6,2], index: 4, kind: input, shape index: {}]
  %s5 = inlined_call_operand.vmem [shape: f32[1,8,1], index: 5, kind: input, shape index: {}]
  %s6 = inlined_call_operand.hbm [shape: f32[2,2,8,8], index: 6, kind: output, shape index: {0}]
  %s7 = inlined_call_operand.hbm [shape: f32[2,1,128], index: 7, kind: output, shape index: {1}]
  %8 = xla_tuple %s6, %s7
  %s9 = sld [smem:[#allocation0]]
  $region69: #{tpu_custom_call.1} parent=0
    _
  %s11 = ssub.s32 1, %s9
  %s12 = scalar_select 0, %s11, %s9
  $region1: #{tpu_custom_call.1} parent=0
    #allocation2 [shape = 'u8[16384]{0}', space=vmem, size = 0x4000, scoped, tag = 'output window, operand 0']
    #allocation3 [shape = 's32[2]{0}', space=sflag, size = 0x8, scoped, tag = 'scoped memory for tpu_custom_call.1']
    #allocation4 [shape = 'u8[1024]{0}', space=vmem, size = 0x400, scoped, tag = 'output window, operand 1']
    #allocation5 [shape = 's32[2]{0}', space=sflag, size = 0x8, scoped, tag = 'scoped memory for tpu_custom_call.1']
    %13 = vsyncpa [#allocation3], 0
    %s14 = scalar_lea.sflag [#allocation3], 1
    %15 = vsyncpa %s14, 0
    %16 = vsyncpa [#allocation5], 0
    %s17 = scalar_lea.sflag [#allocation5], 1
    %18 = vsyncpa %s17, 0
    loop: start=0, step=1, limit=4
    $region2: #{tpu_custom_call.1} parent=1 // loop_pre_header
      _
    $region3: #{tpu_custom_call.1} parent=1 // loop_header
      %s20 = sphi 0, %s24
      %p21 = scmp.ge.s32.totalorder %s20, 4
      %s27 = sphi 0, %s39
      %s28 = sphi 0, %s35
      %s29 = sphi 0, %s27
      %s30 = sphi 0, %s28
      %s31 = sphi 0, %s29
      %s32 = sphi 0, %s30
      %s44 = sphi 0, %s46
      %s47 = sphi 0, %s44
      %s48 = sphi 0, %s47
      %s64 = sphi 0, %s48
      %s70 = sphi 0, %s72
      %s73 = sphi 0, %s70
      %s74 = sphi 0, %s73
      %s90 = sphi 0, %s74
      %s96 = sphi 0, %s98
      %s99 = sphi 0, %s96
      %s100 = sphi 0, %s99
      %s116 = sphi 0, %s100
      %s122 = sphi 0, %s124
      %s125 = sphi 0, %s122
      %s126 = sphi 0, %s125
      %s142 = sphi 0, %s126
      %s148 = sphi 0, %s150
      %s151 = sphi 0, %s148
      %s152 = sphi 0, %s151
      %s168 = sphi 0, %s152
      %s172 = sphi 0, %s172
      %s174 = sphi 0, %s172
      %s175 = sphi 0, %s174
      %s189 = sphi 0, %s175
      %s197 = sphi 0, %s199
      %s200 = sphi 0, %s197
      %s201 = sphi 0, %s200
      %s217 = sphi 0, %s201
      %s223 = sphi 0, %s225
      %s226 = sphi 0, %s223
      %s227 = sphi 0, %s226
      %s243 = sphi 0, %s227
    $region4: #{tpu_custom_call.1} parent=1 // loop_header_branch
      %23 = sbr.rel (%p21) target = $region8
    $region5: #{tpu_custom_call.1} parent=1 // loop_body
      %s25 = ssub.s32 %s20, 1
      %s26 = ssub.s32 %s20, 2
      %s33 = sadd.s32 1, %s28
      %p34 = scmp.ge.s32.totalorder %s33, 1
      %s35 = scalar_select %p34, 0, %s33
      %s36 = sadd.s32 1, %s27
      %s37 = scalar_select %p34, %s36, %s27
      %p38 = scmp.ge.s32.totalorder %s37, 2
      %s39 = scalar_select %p38, 0, %s37
      %s40 = ssub.s32 %s27, %s39
      %s41 = ssub.s32 %s28, %s35
      %s42 = sor.u32 %s40, %s41
      %p43 = scmp.eq.s32.totalorder %s42, 0
      %s45 = sadd.s32 %s44, 1
      %s46 = scalar_select %p43, %s44, %s45
      %p49 = pneg %p43
      %p50 = scmp.eq.s32.totalorder %s20, 1
      %p51 = por %p49, %p50
      %p52 = scmp.ne.s32.totalorder %s44, %s47
      %p53 = scmp.eq.s32.totalorder %s20, 0
      %p54 = por %p52, %p53
      %p55 = scmp.ne.s32.totalorder %s44, %s47
      %p56 = scmp.eq.s32.totalorder %s25, 1
      %p57 = por %p55, %p56
      %p58 = scmp.ne.s32.totalorder %s47, %s48
      %p59 = scmp.eq.s32.totalorder %s25, 0
      %p60 = por %p58, %p59
      %p61 = scmp.ne.s32.totalorder %s47, %s48
      %p62 = scmp.eq.s32.totalorder %s26, 1
      %p63 = por %p61, %p62
      %p65 = scmp.ne.s32.totalorder %s48, %s64
      %p66 = scmp.eq.s32.totalorder %s26, 0
      %p67 = por %p65, %p66
      %s68 = ssub.s32 %s27, %s39
      %p69 = scmp.eq.s32.totalorder %s68, 0
      %s71 = sadd.s32 %s70, 1
      %s72 = scalar_select %p69, %s70, %s71
      %p75 = pneg %p69
      %p76 = scmp.eq.s32.totalorder %s20, 1
      %p77 = por %p75, %p76
      %p78 = scmp.ne.s32.totalorder %s70, %s73
      %p79 = scmp.eq.s32.totalorder %s20, 0
      %p80 = por %p78, %p79
      %p81 = scmp.ne.s32.totalorder %s70, %s73
      %p82 = scmp.eq.s32.totalorder %s25, 1
      %p83 = por %p81, %p82
      %p84 = scmp.ne.s32.totalorder %s73, %s74
      %p85 = scmp.eq.s32.totalorder %s25, 0
      %p86 = por %p84, %p85
      %p87 = scmp.ne.s32.totalorder %s73, %s74
      %p88 = scmp.eq.s32.totalorder %s26, 1
      %p89 = por %p87, %p88
      %p91 = scmp.ne.s32.totalorder %s74, %s90
      %p92 = scmp.eq.s32.totalorder %s26, 0
      %p93 = por %p91, %p92
      %s94 = ssub.s32 %s27, %s39
      %p95 = scmp.eq.s32.totalorder %s94, 0
      %s97 = sadd.s32 %s96, 1
      %s98 = scalar_select %p95, %s96, %s97
      %p101 = pneg %p95
      %p102 = scmp.eq.s32.totalorder %s20, 1
      %p103 = por %p101, %p102
      %p104 = scmp.ne.s32.totalorder %s96, %s99
      %p105 = scmp.eq.s32.totalorder %s20, 0
      %p106 = por %p104, %p105
      %p107 = scmp.ne.s32.totalorder %s96, %s99
      %p108 = scmp.eq.s32.totalorder %s25, 1
      %p109 = por %p107, %p108
      %p110 = scmp.ne.s32.totalorder %s99, %s100
      %p111 = scmp.eq.s32.totalorder %s25, 0
      %p112 = por %p110, %p111
      %p113 = scmp.ne.s32.totalorder %s99, %s100
      %p114 = scmp.eq.s32.totalorder %s26, 1
      %p115 = por %p113, %p114
      %p117 = scmp.ne.s32.totalorder %s100, %s116
      %p118 = scmp.eq.s32.totalorder %s26, 0
      %p119 = por %p117, %p118
      %s120 = ssub.s32 %s27, %s39
      %p121 = scmp.eq.s32.totalorder %s120, 0
      %s123 = sadd.s32 %s122, 1
      %s124 = scalar_select %p121, %s122, %s123
      %p127 = pneg %p121
      %p128 = scmp.eq.s32.totalorder %s20, 1
      %p129 = por %p127, %p128
      %p130 = scmp.ne.s32.totalorder %s122, %s125
      %p131 = scmp.eq.s32.totalorder %s20, 0
      %p132 = por %p130, %p131
      %p133 = scmp.ne.s32.totalorder %s122, %s125
      %p134 = scmp.eq.s32.totalorder %s25, 1
      %p135 = por %p133, %p134
      %p136 = scmp.ne.s32.totalorder %s125, %s126
      %p137 = scmp.eq.s32.totalorder %s25, 0
      %p138 = por %p136, %p137
      %p139 = scmp.ne.s32.totalorder %s125, %s126
      %p140 = scmp.eq.s32.totalorder %s26, 1
      %p141 = por %p139, %p140
      %p143 = scmp.ne.s32.totalorder %s126, %s142
      %p144 = scmp.eq.s32.totalorder %s26, 0
      %p145 = por %p143, %p144
      %s146 = ssub.s32 %s27, %s39
      %p147 = scmp.eq.s32.totalorder %s146, 0
      %s149 = sadd.s32 %s148, 1
      %s150 = scalar_select %p147, %s148, %s149
      %p153 = pneg %p147
      %p154 = scmp.eq.s32.totalorder %s20, 1
      %p155 = por %p153, %p154
      %p156 = scmp.ne.s32.totalorder %s148, %s151
      %p157 = scmp.eq.s32.totalorder %s20, 0
      %p158 = por %p156, %p157
      %p159 = scmp.ne.s32.totalorder %s148, %s151
      %p160 = scmp.eq.s32.totalorder %s25, 1
      %p161 = por %p159, %p160
      %p162 = scmp.ne.s32.totalorder %s151, %s152
      %p163 = scmp.eq.s32.totalorder %s25, 0
      %p164 = por %p162, %p163
      %p165 = scmp.ne.s32.totalorder %s151, %s152
      %p166 = scmp.eq.s32.totalorder %s26, 1
      %p167 = por %p165, %p166
      %p169 = scmp.ne.s32.totalorder %s152, %s168
      %p170 = scmp.eq.s32.totalorder %s26, 0
      %p171 = por %p169, %p170
      %s173 = sadd.s32 %s172, 1
      %p176 = scmp.eq.s32.totalorder %s20, 1
      %p177 = scmp.ne.s32.totalorder %s172, %s174
      %p178 = scmp.eq.s32.totalorder %s20, 0
      %p179 = por %p177, %p178
      %p180 = scmp.ne.s32.totalorder %s172, %s174
      %p181 = scmp.eq.s32.totalorder %s25, 1
      %p182 = por %p180, %p181
      %p183 = scmp.ne.s32.totalorder %s174, %s175
      %p184 = scmp.eq.s32.totalorder %s25, 0
      %p185 = por %p183, %p184
      %p186 = scmp.ne.s32.totalorder %s174, %s175
      %p187 = scmp.eq.s32.totalorder %s26, 1
      %p188 = por %p186, %p187
      %p190 = scmp.ne.s32.totalorder %s175, %s189
      %p191 = scmp.eq.s32.totalorder %s26, 0
      %p192 = por %p190, %p191
      %s193 = ssub.s32 %s27, %s39
      %s194 = ssub.s32 %s28, %s35
      %s195 = sor.u32 %s193, %s194
      %p196 = scmp.eq.s32.totalorder %s195, 0
      %s198 = sadd.s32 %s197, 1
      %s199 = scalar_select %p196, %s197, %s198
      %p202 = pneg %p196
      %p203 = scmp.eq.s32.totalorder %s20, 1
      %p204 = por %p202, %p203
      %p205 = scmp.ne.s32.totalorder %s197, %s200
      %p206 = scmp.eq.s32.totalorder %s20, 0
      %p207 = por %p205, %p206
      %p208 = scmp.ne.s32.totalorder %s197, %s200
      %p209 = scmp.eq.s32.totalorder %s25, 1
      %p210 = por %p208, %p209
      %p211 = scmp.ne.s32.totalorder %s200, %s201
      %p212 = scmp.eq.s32.totalorder %s25, 0
      %p213 = por %p211, %p212
      %p214 = scmp.ne.s32.totalorder %s200, %s201
      %p215 = scmp.eq.s32.totalorder %s26, 1
      %p216 = por %p214, %p215
      %p218 = scmp.ne.s32.totalorder %s201, %s217
      %p219 = scmp.eq.s32.totalorder %s26, 0
      %p220 = por %p218, %p219
      %s221 = ssub.s32 %s27, %s39
      %p222 = scmp.eq.s32.totalorder %s221, 0
      %s224 = sadd.s32 %s223, 1
      %s225 = scalar_select %p222, %s223, %s224
      %p228 = pneg %p222
      %p229 = scmp.eq.s32.totalorder %s20, 1
      %p230 = por %p228, %p229
      %p231 = scmp.ne.s32.totalorder %s223, %s226
      %p232 = scmp.eq.s32.totalorder %s20, 0
      %p233 = por %p231, %p232
      %p234 = scmp.ne.s32.totalorder %s223, %s226
      %p235 = scmp.eq.s32.totalorder %s25, 1
      %p236 = por %p234, %p235
      %p237 = scmp.ne.s32.totalorder %s226, %s227
      %p238 = scmp.eq.s32.totalorder %s25, 0
      %p239 = por %p237, %p238
      %p240 = scmp.ne.s32.totalorder %s226, %s227
      %p241 = scmp.eq.s32.totalorder %s26, 1
      %p242 = por %p240, %p241
      %p244 = scmp.ne.s32.totalorder %s227, %s243
      %p245 = scmp.eq.s32.totalorder %s26, 0
      %p246 = por %p244, %p245
      %p247 = scmp.le.s32.totalorder 1, %s20
      %p248 = scmp.lt.s32.totalorder %s20, 3
      %p249 = pnand %p247, %p248
      %p250 = pneg %p249
      // Predicated region
      $region9: #{tpu_custom_call.1} parent=5 // pred_check
        _
      $region10: #{tpu_custom_call.1} parent=5 // pred_check_branch
        %252 = sbr.rel (%p249) target = $region12
      $region11: #{tpu_custom_call.1} parent=5 // pred_region
        %s253 = ssub.s32 %s20, 1
        // Predicated region
        $region13: #{tpu_custom_call.1} parent=11 // pred_check
          %p254 = pneg %p185
        $region14: #{tpu_custom_call.1} parent=11 // pred_check_branch
          %256 = sbr.rel (%p254) target = $region16
        $region15: #{tpu_custom_call.1} parent=11 // pred_region
          _
        $region16: #{tpu_custom_call.1} parent=11 // pred_fallthru
          _
      $region12: #{tpu_custom_call.1} parent=5 // pred_fallthru
        _
      %p257 = scmp.lt.s32.totalorder %s20, 2
      // Predicated region
      $region17: #{tpu_custom_call.1} parent=5 // pred_check
        %p258 = pneg %p257
      $region18: #{tpu_custom_call.1} parent=5 // pred_check_branch
        %260 = sbr.rel (%p258) target = $region20
      $region19: #{tpu_custom_call.1} parent=5 // pred_region
        // Predicated region
        $region21: #{tpu_custom_call.1} parent=19 // pred_check
          %p261 = pneg %p54
        $region22: #{tpu_custom_call.1} parent=19 // pred_check_branch
          %263 = sbr.rel (%p261) target = $region24
        $region23: #{tpu_custom_call.1} parent=19 // pred_region
          %p264 = scmp.lt.s32.totalorder %s27, 1
          %s265 = scalar_select %p264, %s27, 1
          %p266 = scmp.lt.s32.totalorder %s28, 0
          %s267 = scalar_select %p266, %s28, 0
          %s268 = smul.addr %s265, 2
          %s269 = sadd.s32 %s267, %s268
          %s270 = smul.addr %s269, 8
          %s271 = scalar_lea.vmem %s0, %s270
        $region24: #{tpu_custom_call.1} parent=19 // pred_fallthru
          _
        // Predicated region
        $region25: #{tpu_custom_call.1} parent=19 // pred_check
          %p272 = pneg %p80
        $region26: #{tpu_custom_call.1} parent=19 // pred_check_branch
          %274 = sbr.rel (%p272) target = $region28
        $region27: #{tpu_custom_call.1} parent=19 // pred_region
          %p275 = scmp.lt.s32.totalorder %s27, 1
          %s276 = scalar_select %p275, %s27, 1
          %s277 = smul.addr %s276, 4
          %s278 = smul.addr %s277, 8
          %s279 = scalar_lea.vmem %s1, %s278
        $region28: #{tpu_custom_call.1} parent=19 // pred_fallthru
          _
        // Predicated region
        $region29: #{tpu_custom_call.1} parent=19 // pred_check
          %p280 = pneg %p106
        $region30: #{tpu_custom_call.1} parent=19 // pred_check_branch
          %282 = sbr.rel (%p280) target = $region32
        $region31: #{tpu_custom_call.1} parent=19 // pred_region
          %p283 = scmp.lt.s32.totalorder %s27, 1
          %s284 = scalar_select %p283, %s27, 1
          %s285 = smul.addr %s284, 4
          %s286 = smul.addr %s285, 8
          %s287 = scalar_lea.vmem %s2, %s286
        $region32: #{tpu_custom_call.1} parent=19 // pred_fallthru
          _
        // Predicated region
        $region33: #{tpu_custom_call.1} parent=19 // pred_check
          %p288 = pneg %p132
        $region34: #{tpu_custom_call.1} parent=19 // pred_check_branch
          %290 = sbr.rel (%p288) target = $region36
        $region35: #{tpu_custom_call.1} parent=19 // pred_region
          %p291 = scmp.lt.s32.totalorder %s27, 1
          %s292 = scalar_select %p291, %s27, 1
          %s293 = smul.addr %s292, 4
          %s294 = smul.addr %s293, 8
          %s295 = scalar_lea.vmem %s3, %s294
        $region36: #{tpu_custom_call.1} parent=19 // pred_fallthru
          _
        // Predicated region
        $region37: #{tpu_custom_call.1} parent=19 // pred_check
          %p296 = pneg %p158
        $region38: #{tpu_custom_call.1} parent=19 // pred_check_branch
          %298 = sbr.rel (%p296) target = $region40
        $region39: #{tpu_custom_call.1} parent=19 // pred_region
          %p299 = scmp.lt.s32.totalorder %s27, 1
          %s300 = scalar_select %p299, %s27, 1
          %s301 = smul.addr %s300, 2
          %s302 = smul.addr %s301, 8
          %s303 = scalar_lea.vmem %s4, %s302
        $region40: #{tpu_custom_call.1} parent=19 // pred_fallthru
          _
      $region20: #{tpu_custom_call.1} parent=5 // pred_fallthru
        _
      %p304 = scmp.le.s32.totalorder 1, %s20
      %p305 = scmp.lt.s32.totalorder %s20, 3
      %p306 = pnand %p304, %p305
      %p307 = pneg %p306
      // Predicated region
      $region41: #{tpu_custom_call.1} parent=5 // pred_check
        _
      $region42: #{tpu_custom_call.1} parent=5 // pred_check_branch
        %309 = sbr.rel (%p306) target = $region44
      $region43: #{tpu_custom_call.1} parent=5 // pred_region
        %s310 = ssub.s32 %s20, 1
        %p311 = scmp.lt.s32.totalorder %s29, 1
        %s312 = scalar_select %p311, %s29, 1
        %p313 = scmp.lt.s32.totalorder %s30, 0
        %s314 = scalar_select %p313, %s30, 0
        %s315 = smul.addr %s312, 2
        %s316 = sadd.s32 %s314, %s315
        %s317 = smul.addr %s316, 8
        %s318 = scalar_lea.vmem %s0, %s317
        %p319 = pneg %p60
        %p320 = pneg %p57
        %p321 = scmp.lt.s32.totalorder %s29, 1
        %s322 = scalar_select %p321, %s29, 1
        %s323 = smul.addr %s322, 4
        %s324 = smul.addr %s323, 8
        %s325 = scalar_lea.vmem %s1, %s324
        %p326 = pneg %p86
        %p327 = pneg %p83
        %p328 = scmp.lt.s32.totalorder %s29, 1
        %s329 = scalar_select %p328, %s29, 1
        %s330 = smul.addr %s329, 4
        %s331 = smul.addr %s330, 8
        %s332 = scalar_lea.vmem %s2, %s331
        %p333 = pneg %p112
        %p334 = pneg %p109
        %p335 = scmp.lt.s32.totalorder %s29, 1
        %s336 = scalar_select %p335, %s29, 1
        %s337 = smul.addr %s336, 4
        %s338 = smul.addr %s337, 8
        %s339 = scalar_lea.vmem %s3, %s338
        %p340 = pneg %p138
        %p341 = pneg %p135
        %p342 = scmp.lt.s32.totalorder %s29, 1
        %s343 = scalar_select %p342, %s29, 1
        %s344 = smul.addr %s343, 2
        %s345 = smul.addr %s344, 8
        %s346 = scalar_lea.vmem %s4, %s345
        %p347 = pneg %p164
        %p348 = pneg %p161
        %p349 = pneg %p185
        %p350 = pneg %p182
        %p351 = pneg %p213
        %p352 = pneg %p210
        %s353 = sand.u32 %s200, 1
        %s354 = scalar_lea.sflag [#allocation3], %s353
        %s355 = sand.u32 %s200, 1
        %s356 = smul.addr %s355, 16
        %s357 = scalar_lea.vmem [#allocation2], %s356
        %p358 = pneg %p239
        %p359 = pneg %p236
        %s360 = sand.u32 %s226, 1
        %s361 = scalar_lea.sflag [#allocation5], %s360
        %s362 = sand.u32 %s226, 1
        %s363 = scalar_lea.vmem [#allocation4], %s362
        %p364 = scmp.lt.s32.totalorder %s29, 1
        %s365 = scalar_select %p364, %s29, 1
        %p366 = scmp.lt.s32.totalorder %s30, 0
        %s367 = scalar_select %p366, %s30, 0
        %s368 = smul.addr %s365, 2
        %s369 = sadd.s32 %s367, %s368
        %s370 = smul.addr %s369, 8
        %s371 = scalar_lea.vmem %s0, %s370
        %p372 = scmp.lt.s32.totalorder %s29, 1
        %s373 = scalar_select %p372, %s29, 1
        %s374 = smul.addr %s373, 4
        %s375 = smul.addr %s374, 8
        %s376 = scalar_lea.vmem %s1, %s375
        %p377 = scmp.lt.s32.totalorder %s29, 1
        %s378 = scalar_select %p377, %s29, 1
        %s379 = smul.addr %s378, 4
        %s380 = smul.addr %s379, 8
        %s381 = scalar_lea.vmem %s2, %s380
        %p382 = scmp.lt.s32.totalorder %s29, 1
        %s383 = scalar_select %p382, %s29, 1
        %s384 = smul.addr %s383, 4
        %s385 = smul.addr %s384, 8
        %s386 = scalar_lea.vmem %s3, %s385
        %p387 = scmp.lt.s32.totalorder %s29, 1
        %s388 = scalar_select %p387, %s29, 1
        %s389 = smul.addr %s388, 2
        %s390 = smul.addr %s389, 8
        %s391 = scalar_lea.vmem %s4, %s390
        %v393 = vld [vmem:[%s371] sm:$0x3f]
        %v394 = vld [vmem:[%s371 + $0x8] sm:$0x3f]
        %v395 = vld [vmem:[%s376] sm:$0xff]
        %v396 = vld [vmem:[%s376 + $0x8] sm:$0xff]
        %v397 = vld [vmem:[%s376 + $0x10] sm:$0xff]
        %v398 = vld [vmem:[%s376 + $0x18] sm:$0xff]
        %v399 = vld [vmem:[%s381] sm:$0xff]
        %v400 = vld [vmem:[%s381 + $0x8] sm:$0xff]
        %v401 = vld [vmem:[%s381 + $0x10] sm:$0xff]
        %v402 = vld [vmem:[%s381 + $0x18] sm:$0xff]
        %v403 = vld [vmem:[%s386] sm:$0xff]
        %v404 = vld [vmem:[%s386 + $0x8] sm:$0xff]
        %v405 = vld [vmem:[%s386 + $0x10] sm:$0xff]
        %v406 = vld [vmem:[%s386 + $0x18] sm:$0xff]
        %v407 = vld [vmem:[%s391] sm:$0x3f]
        %v408 = vld [vmem:[%s391 + $0x8] sm:$0x3f]
        %v409 = vld [vmem:[%s5] sm:$0xff]
        %v410 = vmul.f32 %v393, 2.0
        %v411 = vmul.f32 %v394, 2.0
        %v412 = vtanh.pop %v410
        %v413 = vtanh.pop %v411
        %v414 = vsub.f32 0.0, %v412
        %v415 = vsub.f32 0.0, %v413
        %v416 = vpack.c.bf16 %v396, %v395
        %v417 = vpack.c.bf16 %v398, %v397
        %v418 = vpack.c.bf16 %v393, %v393
        %v419 = vpack.c.bf16 %v394, %v394
        %v420 = vpack.c.bf16 %v400, %v399
        %v421 = vpack.c.bf16 %v402, %v401
        %v422 = vpack.c.bf16 %v414, %v414
        %v423 = vpack.c.bf16 %v415, %v415
        %vm424 = vcmask 48128
        %v426 = vsel %vm424, %v420, 0
        %vm428 = vcmask 1042432
        %v430 = vsel %vm428, %v422, 0
        %432 = vmatprep.subr.bf16.mxu0 0
        %433 = vmatpush1.bf16.msra.mxu0 0
        %434 = vmatprep.subr.bf16.mxu0 0
        %435 = vmatpush1.bf16.msra.mxu0 0
        %436 = vmatprep.subr.bf16.mxu0 0
        %437 = vmatpush1.bf16.msra.mxu0 0
        %438 = vmatprep.subr.bf16.mxu0 0
        %439 = vmatpush1.bf16.msra.mxu0 0
        %440 = vmatprep.subr.bf16.mxu0 0
        %441 = vmatpush1.bf16.msra.mxu0 0
        %442 = vmatprep.subr.bf16.mxu0 0
        %443 = vmatpush1.bf16.msra.mxu0 0
        %444 = vmatprep.subr.bf16.mxu0 0
        %445 = vmatpush1.bf16.msra.mxu0 0
        %446 = vmatprep.subr.bf16.mxu0 0
        %447 = vmatpush1.bf16.msra.mxu0 %v430
        %448 = vmatprep.subr.bf16.mxu0 0
        %449 = vmatpush2.bf16.msra.mxu0 0
        %450 = vmatprep.subr.bf16.mxu0 0
        %451 = vmatpush2.bf16.msra.mxu0 0
        %452 = vmatprep.subr.bf16.mxu0 0
        %453 = vmatpush2.bf16.msra.mxu0 0
        %454 = vmatprep.subr.bf16.mxu0 0
        %455 = vmatpush2.bf16.msra.mxu0 0
        %456 = vmatprep.subr.bf16.mxu0 0
        %457 = vmatpush2.bf16.msra.mxu0 0
        %458 = vmatprep.subr.bf16.mxu0 0
        %459 = vmatpush2.bf16.msra.mxu0 0
        %460 = vmatprep.subr.bf16.mxu0 0
        %461 = vmatpush2.bf16.msra.mxu0 0
        %462 = vmatprep.subr.bf16.mxu0 0
        %463 = vmatpush2.bf16.msra.mxu0 0
        %464 = vmatprep.mubr.bf16.mxu0 0
        %465 = vmatmul.mubr.bf16.gmra.mxu0 %v426
        %v466 = vpop.f32.mrf.mxu0
        %v467 = vadd.f32 0.0, %v466
        %v468 = vpop.f32.mrf.mxu0
        %v469 = vpop.f32.mrf.mxu0
        %v470 = vadd.f32 0.0, %v469
        %v471 = vpop.f32.mrf.mxu0
        %472 = vdwg.mxu0
        %v474 = vsel %vm424, %v421, 0
        %v477 = vsel %vm428, %v423, 0
        %479 = vmatprep.subr.bf16.mxu0 0
        %480 = vmatpush1.bf16.msra.mxu0 0
        %481 = vmatprep.subr.bf16.mxu0 0
        %482 = vmatpush1.bf16.msra.mxu0 0
        %483 = vmatprep.subr.bf16.mxu0 0
        %484 = vmatpush1.bf16.msra.mxu0 0
        %485 = vmatprep.subr.bf16.mxu0 0
        %486 = vmatpush1.bf16.msra.mxu0 0
        %487 = vmatprep.subr.bf16.mxu0 0
        %488 = vmatpush1.bf16.msra.mxu0 0
        %489 = vmatprep.subr.bf16.mxu0 0
        %490 = vmatpush1.bf16.msra.mxu0 0
        %491 = vmatprep.subr.bf16.mxu0 0
        %492 = vmatpush1.bf16.msra.mxu0 0
        %493 = vmatprep.subr.bf16.mxu0 0
        %494 = vmatpush1.bf16.msra.mxu0 %v477
        %495 = vmatprep.subr.bf16.mxu0 0
        %496 = vmatpush2.bf16.msra.mxu0 0
        %497 = vmatprep.subr.bf16.mxu0 0
        %498 = vmatpush2.bf16.msra.mxu0 0
        %499 = vmatprep.subr.bf16.mxu0 0
        %500 = vmatpush2.bf16.msra.mxu0 0
        %501 = vmatprep.subr.bf16.mxu0 0
        %502 = vmatpush2.bf16.msra.mxu0 0
        %503 = vmatprep.subr.bf16.mxu0 0
        %504 = vmatpush2.bf16.msra.mxu0 0
        %505 = vmatprep.subr.bf16.mxu0 0
        %506 = vmatpush2.bf16.msra.mxu0 0
        %507 = vmatprep.subr.bf16.mxu0 0
        %508 = vmatpush2.bf16.msra.mxu0 0
        %509 = vmatprep.subr.bf16.mxu0 0
        %510 = vmatpush2.bf16.msra.mxu0 0
        %511 = vmatprep.mubr.bf16.mxu0 0
        %512 = vmatmul.mubr.bf16.gmra.mxu0 %v474
        %v513 = vpop.f32.mrf.mxu0
        %v514 = vadd.f32 0.0, %v513
        %v515 = vpop.f32.mrf.mxu0
        %v516 = vpop.f32.mrf.mxu0
        %v517 = vadd.f32 0.0, %v516
        %v518 = vpop.f32.mrf.mxu0
        %519 = vdwg.mxu0
        %v521 = vsel %vm424, %v416, 0
        %v524 = vsel %vm428, %v418, 0
        %526 = vmatprep.subr.bf16.mxu0 0
        %527 = vmatpush1.bf16.msra.mxu0 0
        %528 = vmatprep.subr.bf16.mxu0 0
        %529 = vmatpush1.bf16.msra.mxu0 0
        %530 = vmatprep.subr.bf16.mxu0 0
        %531 = vmatpush1.bf16.msra.mxu0 0
        %532 = vmatprep.subr.bf16.mxu0 0
        %533 = vmatpush1.bf16.msra.mxu0 0
        %534 = vmatprep.subr.bf16.mxu0 0
        %535 = vmatpush1.bf16.msra.mxu0 0
        %536 = vmatprep.subr.bf16.mxu0 0
        %537 = vmatpush1.bf16.msra.mxu0 0
        %538 = vmatprep.subr.bf16.mxu0 0
        %539 = vmatpush1.bf16.msra.mxu0 0
        %540 = vmatprep.subr.bf16.mxu0 0
        %541 = vmatpush1.bf16.msra.mxu0 %v524
        %542 = vmatprep.subr.bf16.mxu0 0
        %543 = vmatpush2.bf16.msra.mxu0 0
        %544 = vmatprep.subr.bf16.mxu0 0
        %545 = vmatpush2.bf16.msra.mxu0 0
        %546 = vmatprep.subr.bf16.mxu0 0
        %547 = vmatpush2.bf16.msra.mxu0 0
        %548 = vmatprep.subr.bf16.mxu0 0
        %549 = vmatpush2.bf16.msra.mxu0 0
        %550 = vmatprep.subr.bf16.mxu0 0
        %551 = vmatpush2.bf16.msra.mxu0 0
        %552 = vmatprep.subr.bf16.mxu0 0
        %553 = vmatpush2.bf16.msra.mxu0 0
        %554 = vmatprep.subr.bf16.mxu0 0
        %555 = vmatpush2.bf16.msra.mxu0 0
        %556 = vmatprep.subr.bf16.mxu0 0
        %557 = vmatpush2.bf16.msra.mxu0 0
        %558 = vmatprep.mubr.bf16.mxu0 0
        %559 = vmatmul.mubr.bf16.gmra.mxu0 %v521
        %v560 = vpop.f32.mrf.mxu0
        %v561 = vadd.f32 %v467, %v560
        %v562 = vpop.f32.mrf.mxu0
        %v563 = vpop.f32.mrf.mxu0
        %v564 = vadd.f32 %v470, %v563
        %v565 = vpop.f32.mrf.mxu0
        %566 = vdwg.mxu0
        %v568 = vsel %vm424, %v417, 0
        %v571 = vsel %vm428, %v419, 0
        %573 = vmatprep.subr.bf16.mxu0 0
        %574 = vmatpush1.bf16.msra.mxu0 0
        %575 = vmatprep.subr.bf16.mxu0 0
        %576 = vmatpush1.bf16.msra.mxu0 0
        %577 = vmatprep.subr.bf16.mxu0 0
        %578 = vmatpush1.bf16.msra.mxu0 0
        %579 = vmatprep.subr.bf16.mxu0 0
        %580 = vmatpush1.bf16.msra.mxu0 0
        %581 = vmatprep.subr.bf16.mxu0 0
        %582 = vmatpush1.bf16.msra.mxu0 0
        %583 = vmatprep.subr.bf16.mxu0 0
        %584 = vmatpush1.bf16.msra.mxu0 0
        %585 = vmatprep.subr.bf16.mxu0 0
        %586 = vmatpush1.bf16.msra.mxu0 0
        %587 = vmatprep.subr.bf16.mxu0 0
        %588 = vmatpush1.bf16.msra.mxu0 %v571
        %589 = vmatprep.subr.bf16.mxu0 0
        %590 = vmatpush2.bf16.msra.mxu0 0
        %591 = vmatprep.subr.bf16.mxu0 0
        %592 = vmatpush2.bf16.msra.mxu0 0
        %593 = vmatprep.subr.bf16.mxu0 0
        %594 = vmatpush2.bf16.msra.mxu0 0
        %595 = vmatprep.subr.bf16.mxu0 0
        %596 = vmatpush2.bf16.msra.mxu0 0
        %597 = vmatprep.subr.bf16.mxu0 0
        %598 = vmatpush2.bf16.msra.mxu0 0
        %599 = vmatprep.subr.bf16.mxu0 0
        %600 = vmatpush2.bf16.msra.mxu0 0
        %601 = vmatprep.subr.bf16.mxu0 0
        %602 = vmatpush2.bf16.msra.mxu0 0
        %603 = vmatprep.subr.bf16.mxu0 0
        %604 = vmatpush2.bf16.msra.mxu0 0
        %605 = vmatprep.mubr.bf16.mxu0 0
        %606 = vmatmul.mubr.bf16.gmra.mxu0 %v568
        %v607 = vpop.f32.mrf.mxu0
        %v608 = vadd.f32 %v514, %v607
        %v609 = vpop.f32.mrf.mxu0
        %v610 = vpop.f32.mrf.mxu0
        %v611 = vadd.f32 %v517, %v610
        %v612 = vpop.f32.mrf.mxu0
        %613 = vdwg.mxu0
        %615 = vset.pattern.permute.xlu0 0
        %616 = vperm.xlu0 %615, %v403
        %v617 = vpop.permute.xlu0 %616
        %620 = vset.pattern.permute.xlu0 0
        %621 = vperm.xlu0 %620, %v404
        %v622 = vpop.permute.xlu0 %621
        %625 = vset.pattern.permute.xlu0 0
        %626 = vperm.xlu0 %625, %v405
        %v627 = vpop.permute.xlu0 %626
        %630 = vset.pattern.permute.xlu0 0
        %631 = vperm.xlu0 %630, %v406
        %v632 = vpop.permute.xlu0 %631
        %v634 = vadd.f32 %v561, %v617
        %v635 = vadd.f32 %v564, %v622
        %v636 = vadd.f32 %v608, %v627
        %v637 = vadd.f32 %v611, %v632
        %v638 = vmul.f32 %v634, 2.0
        %v639 = vmul.f32 %v636, 2.0
        %v640 = vtanh.pop %v638
        %v641 = vtanh.pop %v639
        %v642 = vadd.f32 %v640, 0.0
        %v643 = vadd.f32 %v641, 0.0
        %vm644 = vcmask 64512
        %645 = vst.msk [vmem:[%s357] sm:$0xff] %vm644, %v642
        %646 = vst.msk [vmem:[%s357 + $0x8] sm:$0xff] %vm644, %v643
        %v647 = vmul.f32 %v393, %v393
        %v648 = vmul.f32 %v394, %v394
        %650 = vset.pattern.permute.xlu0 0
        %651 = vperm.xlu0 %650, %v407
        %v652 = vpop.permute.xlu0 %651
        %655 = vset.pattern.permute.xlu0 0
        %656 = vperm.xlu0 %655, %v408
        %v657 = vpop.permute.xlu0 %656
        %v659 = vmul.f32 %v647, %v652
        %v660 = vmul.f32 %v648, %v657
        %vm661 = vcmask 62464
        %v662 = vsel %vm661, %v659, 0.0
        %v663 = vsel %vm661, %v660, 0.0
        %v664 = vadd.f32 %v662, %v663
        %665 = vadd.xlane.f32.xlu0 %v664
        %v666 = vpop.xlane.xlu0 %665
        %v667 = vrot.slane %v666, 4
        %v668 = vadd.f32 %v666, %v667
        %v669 = vrot.slane %v668, 2
        %v670 = vadd.f32 %v668, %v669
        %v671 = vrot.slane %v670, 1
        %v672 = vadd.f32 %v670, %v671
        %s673 = vtos %v672
        %v674 = vmul.f32 %v414, %v414
        %v675 = vmul.f32 %v415, %v415
        %676 = vset.pattern.permute.xlu0 1
        %677 = vperm.xlu0 %676, %v407
        %v678 = vpop.permute.xlu0 %677
        %680 = vset.pattern.permute.xlu0 1
        %681 = vperm.xlu0 %680, %v408
        %v682 = vpop.permute.xlu0 %681
        %v684 = vmul.f32 %v674, %v678
        %v685 = vmul.f32 %v675, %v682
        %v686 = vsel %vm661, %v684, 0.0
        %v687 = vsel %vm661, %v685, 0.0
        %v688 = vadd.f32 %v686, %v687
        %689 = vadd.xlane.f32.xlu0 %v688
        %v690 = vpop.xlane.xlu0 %689
        %v691 = vrot.slane %v690, 4
        %v692 = vadd.f32 %v690, %v691
        %v693 = vrot.slane %v692, 2
        %v694 = vadd.f32 %v692, %v693
        %v695 = vrot.slane %v694, 1
        %v696 = vadd.f32 %v694, %v695
        %s697 = vtos %v696
        %s698 = sadd.f32 %s673, %s697
        %v699 = vmul.f32 %v634, %v635
        %v700 = vmul.f32 %v636, %v637
        %v701 = vsel %vm644, %v699, 0.0
        %v702 = vsel %vm644, %v700, 0.0
        %v703 = vadd.f32 %v701, %v702
        %704 = vadd.xlane.f32.xlu0 %v703
        %v705 = vpop.xlane.xlu0 %704
        %v706 = vrot.slane %v705, 4
        %v707 = vadd.f32 %v705, %v706
        %v708 = vrot.slane %v707, 2
        %v709 = vadd.f32 %v707, %v708
        %v710 = vrot.slane %v709, 1
        %v711 = vadd.f32 %v709, %v710
        %s712 = vtos %v711
        %s713 = smul.f32 %s712, -2.0
        %v714 = vmul.f32 %v634, %v634
        %v715 = vmul.f32 %v636, %v636
        %717 = vset.pattern.permute.xlu0 0
        %718 = vperm.xlu0 %717, %v409
        %v719 = vpop.permute.xlu0 %718
        %v721 = vmul.f32 %v714, %v719
        %v722 = vmul.f32 %v715, %v719
        %v723 = vsel %vm644, %v721, 0.0
        %v724 = vsel %vm644, %v722, 0.0
        %v725 = vadd.f32 %v723, %v724
        %726 = vadd.xlane.f32.xlu0 %v725
        %v727 = vpop.xlane.xlu0 %726
        %v728 = vrot.slane %v727, 4
        %v729 = vadd.f32 %v727, %v728
        %v730 = vrot.slane %v729, 2
        %v731 = vadd.f32 %v729, %v730
        %v732 = vrot.slane %v731, 1
        %v733 = vadd.f32 %v731, %v732
        %s734 = vtos %v733
        %s735 = sadd.f32 %s698, %s713
        %s736 = sadd.f32 %s735, %s734
        %p737 = scmp.eq.s32.totalorder %s30, 0
        // Predicated region
        $region45: #{tpu_custom_call.1} parent=43 // pred_check
          %p738 = pneg %p737
        $region46: #{tpu_custom_call.1} parent=43 // pred_check_branch
          %740 = sbr.rel (%p738) target = $region48
        $region47: #{tpu_custom_call.1} parent=43 // pred_region
          %741 = vst [vmem:[%s363] sm:$0x1] 0.0
        $region48: #{tpu_custom_call.1} parent=43 // pred_fallthru
          _
        %v742 = vld [vmem:[%s363] sm:$0x1]
        %v743 = vstv %s736
        %v744 = vadd.f32 %v742, %v743
        %745 = vst [vmem:[%s363] sm:$0x1] %v744
        %s746 = sand.u32 %s200, 1
        %s747 = scalar_lea.sflag [#allocation3], %s746
        %s748 = sand.u32 %s200, 1
        %s749 = smul.addr %s748, 16
        %s750 = scalar_lea.vmem [#allocation2], %s749
        %s751 = sand.u32 %s226, 1
        %s752 = scalar_lea.sflag [#allocation5], %s751
        %s753 = sand.u32 %s226, 1
        %s754 = scalar_lea.vmem [#allocation4], %s753
        // Predicated region
        $region49: #{tpu_custom_call.1} parent=43 // pred_check
          %p755 = pneg %p210
        $region50: #{tpu_custom_call.1} parent=43 // pred_check_branch
          %757 = sbr.rel (%p755) target = $region52
        $region51: #{tpu_custom_call.1} parent=43 // pred_region
          %s759 = ssub.s32 256, 256
          %760 = vsyncadd %s747, %s759
          %s761 = smul.addr %s29, 2
          %s762 = sadd.s32 %s30, %s761
          %s763 = smul.addr %s762, 128
          %s764 = scalar_lea.hbm %s6, %s763
          %s765 = sshll.u32 %s750, 4
          %s766 = int_to_ptr.vmem [resolvable:$true] %s765
          %771 = dma.vmem_to_hbm [thread:$0]  %s766, 256, %s764, %s747, 128, 128, 8
        $region52: #{tpu_custom_call.1} parent=43 // pred_fallthru
          _
        // Predicated region
        $region53: #{tpu_custom_call.1} parent=43 // pred_check
          %p772 = pneg %p236
        $region54: #{tpu_custom_call.1} parent=43 // pred_check_branch
          %774 = sbr.rel (%p772) target = $region56
        $region55: #{tpu_custom_call.1} parent=43 // pred_region
          %s776 = ssub.s32 16, 16
          %777 = vsyncadd %s752, %s776
          %s778 = smul.addr %s29, 16
          %s779 = scalar_lea.hbm %s7, %s778
          %s781 = sshll.u32 %s754, 4
          %s782 = int_to_ptr.vmem [resolvable:$true] %s781
          %784 = dma.vmem_to_hbm [thread:$0]  %s782, 16, %s779, %s752
        $region56: #{tpu_custom_call.1} parent=43 // pred_fallthru
          _
      $region44: #{tpu_custom_call.1} parent=5 // pred_fallthru
        _
      %p785 = scmp.le.s32.totalorder 2, %s20
      // Predicated region
      $region57: #{tpu_custom_call.1} parent=5 // pred_check
        %p786 = pneg %p785
      $region58: #{tpu_custom_call.1} parent=5 // pred_check_branch
        %788 = sbr.rel (%p786) target = $region60
      $region59: #{tpu_custom_call.1} parent=5 // pred_region
        %s789 = ssub.s32 %s20, 2
        // Predicated region
        $region61: #{tpu_custom_call.1} parent=59 // pred_check
          %p790 = pneg %p216
        $region62: #{tpu_custom_call.1} parent=59 // pred_check_branch
          %792 = sbr.rel (%p790) target = $region64
        $region63: #{tpu_custom_call.1} parent=59 // pred_region
          %s793 = sand.u32 %s201, 1
          %s794 = scalar_lea.sflag [#allocation3], %s793
          %s795 = sand.u32 %s201, 1
          %s796 = smul.addr %s795, 16
          %s797 = scalar_lea.vmem [#allocation2], %s796
          %798 = dma.done %s794, 256
        $region64: #{tpu_custom_call.1} parent=59 // pred_fallthru
          _
        // Predicated region
        $region65: #{tpu_custom_call.1} parent=59 // pred_check
          %p799 = pneg %p242
        $region66: #{tpu_custom_call.1} parent=59 // pred_check_branch
          %801 = sbr.rel (%p799) target = $region68
        $region67: #{tpu_custom_call.1} parent=59 // pred_region
          %s802 = sand.u32 %s227, 1
          %s803 = scalar_lea.sflag [#allocation5], %s802
          %s804 = sand.u32 %s227, 1
          %s805 = scalar_lea.vmem [#allocation4], %s804
          %806 = dma.done %s803, 16
        $region68: #{tpu_custom_call.1} parent=59 // pred_fallthru
          _
      $region60: #{tpu_custom_call.1} parent=5 // pred_fallthru
        _
    $region6: #{tpu_custom_call.1} parent=1 // loop_footer
      %s24 = sadd.s32 1, %s20
    $region7: #{tpu_custom_call.1} parent=1 // loop_footer_branch
      %19 = sbr.rel target = $region3
    $region8: #{tpu_custom_call.1} parent=1 // loop_exit
      _
    %807 = vsyncpa [#allocation3], 1
    %s808 = scalar_lea.sflag [#allocation3], 1
    %809 = vsyncpa %s808, 1
    %810 = vsyncpa [#allocation5], 1
    %s811 = scalar_lea.sflag [#allocation5], 1
    %812 = vsyncpa %s811, 1

</llo_original>
